<compile_context>
chip_gen: v7x
topology: tpu7x:2x2x1
jax: 0.10.0
libtpu: 0.0.40
codegen_flags: <defaults>
</compile_context>

<pallas_src>
import functools

import jax
import jax.numpy as jnp
from jax.experimental import pallas as pl
from jax.experimental.pallas import tpu as pltpu


def _sliding_sum(xp, K, Lp):
    """Width-K sliding sum along axis 0 of xp (logical length Lp).

    Returns acc with acc[t] = sum_{j<K} xp[t+j], length Lp - K + 1.
    Uses binary doubling of partial window sums: ~log2(K)+popcount(K) adds
    instead of K (all slices are static; Python loop runs at trace time).
    """
    acc, a = None, 0          # acc[t] = sum_{j<a} xp[t+j],   len = Lp - a + 1
    chunk, c = xp, 1          # chunk[t] = sum_{j<c} xp[t+j], len = Lp - c + 1
    kk = K
    while kk:
        if kk & 1:
            if acc is None:
                acc, a = chunk, c
            else:
                n = Lp - (a + c) + 1
                acc = acc[:n] + chunk[a:a + n]
                a += c
        kk >>= 1
        if kk:
            n = Lp - 2 * c + 1
            chunk = chunk[:n] + chunk[c:c + n]
            c *= 2
    return acc


def _series_decomp_kernel(x_ref, res_ref, mean_ref, xp_ref, *, K, pad):
    # Block layout: time on sublanes, folded (batch*channel) on lanes.
    #   x_ref:   (L, Nt)  input tile
    #   xp_ref:  (L + 2*pad, Nt) f32 VMEM scratch holding the padded series
    #   outputs: (L, Nt)
    L, Nt = x_ref.shape
    x = x_ref[...].astype(jnp.float32)          # f32 accumulation (v5e-safe)

    # In-kernel edge-replication padding: built in VMEM scratch, never in HBM.
    xp_ref[pl.ds(pad, L), :] = x
    if pad > 0:
        xp_ref[pl.ds(0, pad), :] = jnp.broadcast_to(x[0:1, :], (pad, Nt))
        xp_ref[pl.ds(L + pad, pad), :] = jnp.broadcast_to(x[L - 1:L, :], (pad, Nt))
    xp = xp_ref[...]                            # (L + 2*pad, Nt)

    Lp = L + 2 * pad
    acc = _sliding_sum(xp, K, Lp)               # (L, Nt) window sums
    mean = acc * (1.0 / K)

    # Two lane-dense stores (the module returns both res and moving_mean).
    res_ref[...] = (x - mean).astype(res_ref.dtype)
    mean_ref[...] = mean.astype(mean_ref.dtype)


def _pick_lane_tile(n, L):
    """Lane-tile for the folded (B*C) axis: multiple of 128 (or the whole
    axis), <= ~2 MiB per f32 buffer, and >=2 grid steps when wide enough so
    the pipeline and both v7x TensorCores have work."""
    if n <= 256:
        return n                                 # small folded axis: take whole
    cap = max(128, ((2 * 1024 * 1024) // (4 * max(L, 1))) // 128 * 128)
    want = 256 if n <= 1024 else 512
    return min(want, cap)


def series_decomp(x, kernel_size):
    """Pallas TPU implementation of series_decomp.forward.

    x: (B, L, C) float array.  Returns (res, moving_mean), both (B, L, C).
    """
    B, L, C = x.shape
    assert kernel_size >= 1 and kernel_size % 2 == 1, "only odd kernel_size supported"
    pad = (kernel_size - 1) // 2

    # Lane-dense layout plumbing: (B, L, C) -> (L, B*C); time -> sublanes,
    # folded batch*channel -> lanes.  (For typical small C this is the single
    # biggest lever; callers that already hold data in this layout can skip
    # the transposes entirely.)
    n = B * C
    x2d = jnp.transpose(x, (1, 0, 2)).reshape(L, n)

    nt = _pick_lane_tile(n, L)                   # multiple of 128 or == n
    grid = (pl.cdiv(n, nt),)                     # partial last tile is masked

    kernel = functools.partial(_series_decomp_kernel, K=kernel_size, pad=pad)

    itemsize = jnp.dtype(x.dtype).itemsize
    n_adds = kernel_size.bit_length() + bin(kernel_size).count("1") + 2
    cost = pl.CostEstimate(
        flops=n_adds * B * L * C,
        transcendentals=0,
        bytes_accessed=3 * B * L * C * itemsize,  # one read + two writes
    )

    res2d, mean2d = pl.pallas_call(
        kernel,
        out_shape=(
            jax.ShapeDtypeStruct((L, n), x.dtype),
            jax.ShapeDtypeStruct((L, n), x.dtype),
        ),
        grid=grid,
        in_specs=[pl.BlockSpec((L, nt), lambda i: (0, i))],
        out_specs=(
            pl.BlockSpec((L, nt), lambda i: (0, i)),
            pl.BlockSpec((L, nt), lambda i: (0, i)),
        ),
        scratch_shapes=[pltpu.VMEM((L + 2 * pad, nt), jnp.float32)],
        compiler_params=pltpu.CompilerParams(
            dimension_semantics=("parallel",),
            vmem_limit_bytes=32 * 1024 * 1024,   # explicit budget (v7x-safe)
        ),
        cost_estimate=cost,
    )(x2d)

    res = jnp.transpose(res2d.reshape(L, B, C), (1, 0, 2))
    mean = jnp.transpose(mean2d.reshape(L, B, C), (1, 0, 2))
    return res, mean


def _reference(x, kernel_size):
    """Plain-JAX reference mirroring the PyTorch module exactly."""
    pad = (kernel_size - 1) // 2
    front = jnp.repeat(x[:, 0:1, :], pad, axis=1)
    end = jnp.repeat(x[:, -1:, :], pad, axis=1)
    xp = jnp.concatenate([front, x, end], axis=1)     # (B, Lp, C)
    L = x.shape[1]
    windows = jnp.stack([xp[:, j:j + L, :] for j in range(kernel_size)], axis=0)
    mean = jnp.mean(windows, axis=0)
    return x - mean, mean


if __name__ == "__main__":
    kernel_size = 5          # odd, as is standard for series_decomp
    B, L, C = 2, 16, 8

    key = jax.random.PRNGKey(0)
    x = jax.random.normal(key, (B, L, C), dtype=jnp.float32)

    res, mean = series_decomp(x, kernel_size)
    res = jax.block_until_ready(res)
    mean = jax.block_until_ready(mean)

    res_ref, mean_ref = _reference(x, kernel_size)
    assert res.shape == (B, L, C) and mean.shape == (B, L, C)
    assert jnp.allclose(mean, mean_ref, atol=1e-5, rtol=1e-5)
    assert jnp.allclose(res, res_ref, atol=1e-5, rtol=1e-5)

    print("KERNEL_OK")
</pallas_src>

<mosaic_0001>
module attributes {stable_mosaic.version = 11 : i64} {
  func.func @_series_decomp_kernel(%arg0: i32, %arg1: memref<16x16xf32, #tpu.memory_space<vmem>>, %arg2: memref<16x16xf32, #tpu.memory_space<vmem>>, %arg3: memref<16x16xf32, #tpu.memory_space<vmem>>, %arg4: memref<20x16xf32, #tpu.memory_space<vmem>>) attributes {dimension_semantics = [#tpu.dimension_semantics<parallel>], iteration_bounds = array<i64: 1>, scalar_prefetch = 0 : i64, scratch_operands = 1 : i64, tpu.core_type = #tpu.core_type<tc>, window_params = [{transform_indices = @transform_0, window_bounds = array<i64: 16, 16>}, {transform_indices = @transform_1, window_bounds = array<i64: 16, 16>}, {transform_indices = @transform_2, window_bounds = array<i64: 16, 16>}]} {
    %c0 = arith.constant 0 : index
    %c0_0 = arith.constant 0 : index
    %0 = vector.load %arg1[%c0, %c0_0] : memref<16x16xf32, #tpu.memory_space<vmem>>, vector<16x16xf32>
    %c2 = arith.constant 2 : index
    %c0_1 = arith.constant 0 : index
    %1 = vector.load %arg4[%c2, %c0_1] : memref<20x16xf32, #tpu.memory_space<vmem>>, vector<16x16xf32>
    tpu.vector_store %arg4[%c2, %c0_1], %0 {strides = array<i32>} : memref<20x16xf32, #tpu.memory_space<vmem>>, vector<16x16xf32>,
    %2 = vector.extract_strided_slice %0 {offsets = [0, 0], sizes = [1, 16], strides = [1, 1]} : vector<16x16xf32> to vector<1x16xf32>
    %3 = vector.shape_cast %2 : vector<1x16xf32> to vector<1x16xf32>
    %4 = vector.broadcast %3 : vector<1x16xf32> to vector<2x16xf32>
    %c0_2 = arith.constant 0 : index
    %c0_3 = arith.constant 0 : index
    %5 = vector.load %arg4[%c0_2, %c0_3] : memref<20x16xf32, #tpu.memory_space<vmem>>, vector<2x16xf32>
    tpu.vector_store %arg4[%c0_2, %c0_3], %4 {strides = array<i32>} : memref<20x16xf32, #tpu.memory_space<vmem>>, vector<2x16xf32>,
    %6 = vector.extract_strided_slice %0 {offsets = [15, 0], sizes = [1, 16], strides = [1, 1]} : vector<16x16xf32> to vector<1x16xf32>
    %7 = vector.shape_cast %6 : vector<1x16xf32> to vector<1x16xf32>
    %8 = vector.broadcast %7 : vector<1x16xf32> to vector<2x16xf32>
    %c18 = arith.constant 18 : index
    %c0_4 = arith.constant 0 : index
    %9 = vector.load %arg4[%c18, %c0_4] : memref<20x16xf32, #tpu.memory_space<vmem>>, vector<2x16xf32>
    tpu.vector_store %arg4[%c18, %c0_4], %8 {strides = array<i32>} : memref<20x16xf32, #tpu.memory_space<vmem>>, vector<2x16xf32>,
    %c0_5 = arith.constant 0 : index
    %c0_6 = arith.constant 0 : index
    %10 = vector.load %arg4[%c0_5, %c0_6] : memref<20x16xf32, #tpu.memory_space<vmem>>, vector<20x16xf32>
    %11 = vector.extract_strided_slice %10 {offsets = [0, 0], sizes = [19, 16], strides = [1, 1]} : vector<20x16xf32> to vector<19x16xf32>
    %12 = vector.extract_strided_slice %10 {offsets = [1, 0], sizes = [19, 16], strides = [1, 1]} : vector<20x16xf32> to vector<19x16xf32>
    %13 = arith.addf %11, %12 : vector<19x16xf32>
    %14 = vector.extract_strided_slice %13 {offsets = [0, 0], sizes = [17, 16], strides = [1, 1]} : vector<19x16xf32> to vector<17x16xf32>
    %15 = vector.extract_strided_slice %13 {offsets = [2, 0], sizes = [17, 16], strides = [1, 1]} : vector<19x16xf32> to vector<17x16xf32>
    %16 = arith.addf %14, %15 : vector<17x16xf32>
    %17 = vector.extract_strided_slice %10 {offsets = [0, 0], sizes = [16, 16], strides = [1, 1]} : vector<20x16xf32> to vector<16x16xf32>
    %18 = vector.extract_strided_slice %16 {offsets = [1, 0], sizes = [16, 16], strides = [1, 1]} : vector<17x16xf32> to vector<16x16xf32>
    %19 = arith.addf %17, %18 : vector<16x16xf32>
    %cst = arith.constant 2.000000e-01 : f32
    %20 = vector.broadcast %cst : f32 to vector<16x16xf32>
    %21 = arith.mulf %19, %20 : vector<16x16xf32>
    %22 = arith.subf %0, %21 : vector<16x16xf32>
    %c0_7 = arith.constant 0 : index
    %c0_8 = arith.constant 0 : index
    %23 = vector.load %arg2[%c0_7, %c0_8] : memref<16x16xf32, #tpu.memory_space<vmem>>, vector<16x16xf32>
    tpu.vector_store %arg2[%c0_7, %c0_8], %22 {strides = array<i32>} : memref<16x16xf32, #tpu.memory_space<vmem>>, vector<16x16xf32>,
    %c0_9 = arith.constant 0 : index
    %c0_10 = arith.constant 0 : index
    %24 = vector.load %arg3[%c0_9, %c0_10] : memref<16x16xf32, #tpu.memory_space<vmem>>, vector<16x16xf32>
    tpu.vector_store %arg3[%c0_9, %c0_10], %21 {strides = array<i32>} : memref<16x16xf32, #tpu.memory_space<vmem>>, vector<16x16xf32>,
    return
  }
  func.func @transform_0(%arg0: i32) -> (i32, i32) {
    %c0_i32 = arith.constant 0 : i32
    %c0_i32_0 = arith.constant 0 : i32
    return %c0_i32, %arg0 : i32, i32
  }
  func.func @transform_1(%arg0: i32) -> (i32, i32) {
    %c0_i32 = arith.constant 0 : i32
    %c0_i32_0 = arith.constant 0 : i32
    return %c0_i32, %arg0 : i32, i32
  }
  func.func @transform_2(%arg0: i32) -> (i32, i32) {
    %c0_i32 = arith.constant 0 : i32
    %c0_i32_0 = arith.constant 0 : i32
    return %c0_i32, %arg0 : i32, i32
  }
}

</mosaic_0001>

<llo_original>
// kernel: tpu_custom_call.1
$region0: #{tpu_custom_call.1}
  #allocation0 [shape = 'u32[]', space=smem, size = 0x4, offset = 0x4, fixed_abs, tag = 'smem constant byte address 0x4 - core index']
  #allocation1 [shape = 'u32[144,128]{1,0:T(1,128)}', space=vmem, size = 0x12000, scoped, tag = 'internal scratch']
  #allocation2 [shape = 'f32[20,16]{1,0:T(8,128)}', space=vmem, size = 0x3000, scoped, tag = 'scratch operand']
  %s0 = inlined_call_operand.hbm [shape: f32[16,16], index: 0, kind: input, shape index: {}]
  %s1 = inlined_call_operand.hbm [shape: f32[16,16], index: 1, kind: output, shape index: {0}]
  %s2 = inlined_call_operand.hbm [shape: f32[16,16], index: 2, kind: output, shape index: {1}]
  %3 = xla_tuple %s1, %s2
  %s4 = sld [smem:[#allocation0]]
  $region26: #{tpu_custom_call.1} parent=0
    _
  %s6 = ssub.s32 1, %s4
  %s7 = scalar_select 0, %s6, %s4
  $region1: #{tpu_custom_call.1} parent=0
    #allocation3 [shape = 'u8[8192]{0}', space=vmem, size = 0x2000, scoped, tag = 'input window, operand 0, single buffered']
    #allocation4 [shape = 's32[1]{0}', space=sflag, size = 0x4, scoped, tag = 'scoped memory for tpu_custom_call.1']
    #allocation5 [shape = 's32[1]{0}', space=sflag, size = 0x4, scoped, tag = 'scoped memory for tpu_custom_call.1']
    #allocation6 [shape = 'u8[8192]{0}', space=vmem, size = 0x2000, scoped, tag = 'output window, operand 0, single buffered']
    #allocation7 [shape = 'u8[8192]{0}', space=vmem, size = 0x2000, scoped, tag = 'output window, operand 1, single buffered']
    #allocation8 [shape = 's32[1]{0}', space=sflag, size = 0x4, scoped, tag = 'scoped memory for tpu_custom_call.1']
    %8 = vsyncpa [#allocation4], 0
    %9 = vsyncpa [#allocation5], 0
    %10 = vsyncpa [#allocation8], 0
    // Predicated region
    $region2: #{tpu_custom_call.1} parent=1 // pred_check
      _
    $region3: #{tpu_custom_call.1} parent=1 // pred_check_branch
      %12 = sbr.rel (0) target = $region5
    $region4: #{tpu_custom_call.1} parent=1 // pred_region
      %s14 = ssub.s32 256, 256
      %15 = vsyncadd [#allocation4], %s14
      %s16 = sshll.u32 [#allocation3], 4
      %s17 = int_to_ptr.vmem [resolvable:$true] %s16
      %22 = dma.hbm_to_vmem [thread:$0]  %s0, 256, %s17, [#allocation4], 128, 128, 8
    $region5: #{tpu_custom_call.1} parent=1 // pred_fallthru
      _
    // Predicated region
    $region6: #{tpu_custom_call.1} parent=1 // pred_check
      _
    $region7: #{tpu_custom_call.1} parent=1 // pred_check_branch
      %24 = sbr.rel (0) target = $region9
    $region8: #{tpu_custom_call.1} parent=1 // pred_region
      %25 = dma.done [#allocation4], 256
    $region9: #{tpu_custom_call.1} parent=1 // pred_fallthru
      _
    %v26 = vld [vmem:[#allocation3] sm:$0xff]
    %v27 = vld [vmem:[#allocation3 + $0x8] sm:$0xff]
    %vm28 = vcmask 130048
    %29 = vst.msk [vmem:[#allocation2 + $0x2] sm:$0xff] %vm28, %v26
    %30 = vst.msk [vmem:[#allocation2 + $0xa] sm:$0xff] %vm28, %v27
    %v31 = vlaneseq
    %v32 = vshrl.u32 %v31, 7
    %v33 = vsub.s32 0, %v32
    %v34 = vrot.slane %v26, %v33
    %vm35 = vcmask 123904
    %36 = vst.msk [vmem:[#allocation2] sm:$0x3] %vm35, %v34
    %v37 = vlaneseq
    %v38 = vshrl.u32 %v37, 7
    %v39 = vsub.s32 7, %v38
    %v40 = vrot.slane %v27, %v39
    %41 = vst.msk [vmem:[#allocation2 + $0x12] sm:$0x3] %vm35, %v40
    %v42 = vld [vmem:[#allocation2] sm:$0xff]
    %v43 = vld [vmem:[#allocation2 + $0x8] sm:$0xff]
    %v44 = vld [vmem:[#allocation2 + $0x10] sm:$0xf]
    %vm48 = vcmask 1046528
    %v49 = vrot.slane %v42, 1
    %v50 = vrot.slane %v43, 1
    %v51 = vsel %vm48, %v49, %v50
    %v52 = vrot.slane %v44, 1
    %v53 = vsel %vm48, %v50, %v52
    %v57 = vadd.f32 %v42, %v51
    %v58 = vadd.f32 %v43, %v53
    %v59 = vadd.f32 %v44, %v52
    %vm63 = vcmask 1045504
    %v64 = vrot.slane %v57, 2
    %v65 = vrot.slane %v58, 2
    %v66 = vsel %vm63, %v64, %v65
    %v67 = vrot.slane %v59, 2
    %v68 = vsel %vm63, %v65, %v67
    %v72 = vadd.f32 %v57, %v66
    %v73 = vadd.f32 %v58, %v68
    %v74 = vadd.f32 %v59, %v67
    %v78 = vrot.slane %v72, 1
    %v79 = vrot.slane %v73, 1
    %v80 = vsel %vm48, %v78, %v79
    %v81 = vrot.slane %v74, 1
    %v82 = vsel %vm48, %v79, %v81
    %v85 = vadd.f32 %v42, %v80
    %v86 = vadd.f32 %v43, %v82
    %v87 = vmul.f32 %v85, 0.2
    %v88 = vmul.f32 %v86, 0.2
    %v89 = vsub.f32 %v26, %v87
    %v90 = vsub.f32 %v27, %v88
    %91 = vst.msk [vmem:[#allocation6] sm:$0xff] %vm28, %v89
    %92 = vst.msk [vmem:[#allocation6 + $0x8] sm:$0xff] %vm28, %v90
    %93 = vst.msk [vmem:[#allocation7] sm:$0xff] %vm28, %v87
    %94 = vst.msk [vmem:[#allocation7 + $0x8] sm:$0xff] %vm28, %v88
    // Predicated region
    $region10: #{tpu_custom_call.1} parent=1 // pred_check
      _
    $region11: #{tpu_custom_call.1} parent=1 // pred_check_branch
      %96 = sbr.rel (0) target = $region13
    $region12: #{tpu_custom_call.1} parent=1 // pred_region
      %s98 = ssub.s32 256, 256
      %99 = vsyncadd [#allocation5], %s98
      %s100 = sshll.u32 [#allocation6], 4
      %s101 = int_to_ptr.vmem [resolvable:$true] %s100
      %106 = dma.vmem_to_hbm [thread:$0]  %s101, 256, %s1, [#allocation5], 128, 128, 8
    $region13: #{tpu_custom_call.1} parent=1 // pred_fallthru
      _
    // Predicated region
    $region14: #{tpu_custom_call.1} parent=1 // pred_check
      _
    $region15: #{tpu_custom_call.1} parent=1 // pred_check_branch
      %108 = sbr.rel (0) target = $region17
    $region16: #{tpu_custom_call.1} parent=1 // pred_region
      %s110 = ssub.s32 256, 256
      %111 = vsyncadd [#allocation8], %s110
      %s112 = sshll.u32 [#allocation7], 4
      %s113 = int_to_ptr.vmem [resolvable:$true] %s112
      %118 = dma.vmem_to_hbm [thread:$0]  %s113, 256, %s2, [#allocation8], 128, 128, 8
    $region17: #{tpu_custom_call.1} parent=1 // pred_fallthru
      _
    // Predicated region
    $region18: #{tpu_custom_call.1} parent=1 // pred_check
      _
    $region19: #{tpu_custom_call.1} parent=1 // pred_check_branch
      %120 = sbr.rel (0) target = $region21
    $region20: #{tpu_custom_call.1} parent=1 // pred_region
      %121 = dma.done [#allocation5], 256
    $region21: #{tpu_custom_call.1} parent=1 // pred_fallthru
      _
    // Predicated region
    $region22: #{tpu_custom_call.1} parent=1 // pred_check
      _
    $region23: #{tpu_custom_call.1} parent=1 // pred_check_branch
      %123 = sbr.rel (0) target = $region25
    $region24: #{tpu_custom_call.1} parent=1 // pred_region
      %124 = dma.done [#allocation8], 256
    $region25: #{tpu_custom_call.1} parent=1 // pred_fallthru
      _
    %125 = vsyncpa [#allocation4], 1
    %126 = vsyncpa [#allocation5], 1
    %127 = vsyncpa [#allocation8], 1

</llo_original>
